<compile_context>
chip_gen: v6e
topology: v6e:2x2x1
jax: 0.10.0
libtpu: 0.0.40
codegen_flags: <defaults>
</compile_context>

<pallas_src>
import jax
import jax.numpy as jnp
import numpy as np
from jax.experimental import pallas as pl
from jax.experimental.pallas import tpu as pltpu


_MAX_TILE_HW = 32 * 1024  # lane-dense spatial tile cap (multiple of 128)


def _simplenet_kernel(x_ref, w_ref, b_ref, o_ref):
    # x_ref: [P*C, tile_hw]        (P packed images for this grid step)
    # w_ref: [P*n_classes, P*C]    block-diagonal folded conv weight
    # b_ref: [P*n_classes, 1]      folded conv bias
    # o_ref: [P*n_classes, tile_hw]
    out = jnp.dot(w_ref[...], x_ref[...], preferred_element_type=jnp.float32)
    o_ref[...] = (out + b_ref[...]).astype(o_ref.dtype)


def simplenet_forward(img, mu, std, weight, bias):
    """img: [N, 3, H, W] float32 (NCHW, like PyTorch).
    weight: [n_classes, 3] (1x1 conv kernel squeezed), bias: [n_classes]."""
    N, C, H, W = img.shape
    n_classes = weight.shape[0]
    HW = H * W

    # ---- fold normalization into the 1x1 conv (wrapper-side, free) ----
    w_fold = weight / std[None, :]          # [n_classes, C]
    b_fold = bias - w_fold @ mu             # [n_classes]  (== bias - weight @ (mu/std))

    # ---- batch-pair sublane packing (pure row-major reshapes, no transpose) ----
    P = 2 if (N % 2 == 0 and N >= 2) else 1
    NP = N // P
    CP, OP = P * C, P * n_classes

    x = img.reshape(N, C, HW).reshape(NP, CP, HW)

    w_pack = jnp.zeros((OP, CP), dtype=w_fold.dtype)
    for p in range(P):
        w_pack = w_pack.at[p * n_classes:(p + 1) * n_classes,
                           p * C:(p + 1) * C].set(w_fold)
    b_pack = jnp.tile(b_fold, P).reshape(OP, 1)

    # ---- lane-dense spatial tiling ----
    if HW <= _MAX_TILE_HW:
        tile_hw = HW                 # full spatial extent (always legal)
    else:
        tile_hw = _MAX_TILE_HW       # multiple of 128; last partial tile is masked
    n_hw = pl.cdiv(HW, tile_hw)

    flops = 2 * N * n_classes * C * HW
    bytes_accessed = 4 * (N * C * HW + N * n_classes * HW + w_pack.size + b_pack.size)

    out = pl.pallas_call(
        _simplenet_kernel,
        out_shape=jax.ShapeDtypeStruct((NP, OP, HW), img.dtype),
        grid_spec=pltpu.PrefetchScalarGridSpec(
            num_scalar_prefetch=0,
            grid=(NP, n_hw),
            in_specs=[
                pl.BlockSpec((None, CP, tile_hw), lambda n, s: (n, 0, s)),  # packed x
                pl.BlockSpec((OP, CP), lambda n, s: (0, 0)),                # folded W
                pl.BlockSpec((OP, 1), lambda n, s: (0, 0)),                 # folded b
            ],
            out_specs=pl.BlockSpec((None, OP, tile_hw), lambda n, s: (n, 0, s)),
        ),
        compiler_params=pltpu.CompilerParams(
            dimension_semantics=("parallel", "parallel"),
            vmem_limit_bytes=32 * 1024 * 1024,
        ),
        cost_estimate=pl.CostEstimate(
            flops=flops, transcendentals=0, bytes_accessed=bytes_accessed),
    )(x, w_pack, b_pack)

    return out.reshape(N, n_classes, HW).reshape(N, n_classes, H, W)


if __name__ == "__main__":
    # Small, deterministic setup consistent with SimpleNet(n_classes=4).
    N, C, H, W = 2, 3, 16, 16
    n_classes = 4

    key = jax.random.PRNGKey(0)
    k_img, k_w, k_b = jax.random.split(key, 3)

    img = jax.random.uniform(k_img, (N, C, H, W), dtype=jnp.float32)

    # ImageNet normalization constants from the module.
    mu = jnp.array([0.485, 0.456, 0.406], dtype=jnp.float32)
    std = jnp.array([0.229, 0.224, 0.225], dtype=jnp.float32)

    # Deterministic Conv2d(3, n_classes, 1) params (PyTorch-style uniform bound).
    fan_in = C * 1 * 1
    bound = 1.0 / np.sqrt(fan_in)
    weight = jax.random.uniform(k_w, (n_classes, C), dtype=jnp.float32,
                                minval=-bound, maxval=bound)
    bias = jax.random.uniform(k_b, (n_classes,), dtype=jnp.float32,
                              minval=-bound, maxval=bound)

    out = simplenet_forward(img, mu, std, weight, bias)
    out = jax.block_until_ready(out)

    # Pure-JAX reference (un-folded form, matching the PyTorch module exactly).
    xn_ref = (img - mu.reshape(1, C, 1, 1)) / std.reshape(1, C, 1, 1)
    ref = jnp.einsum("oc,nchw->nohw", weight, xn_ref) + bias.reshape(1, n_classes, 1, 1)
    np.testing.assert_allclose(np.asarray(out), np.asarray(ref), rtol=1e-5, atol=1e-5)

    print("KERNEL_OK")
</pallas_src>

<mosaic_0001>
module attributes {stable_mosaic.version = 11 : i64} {
  func.func @_simplenet_kernel(%arg0: i32, %arg1: i32, %arg2: memref<1x6x256xf32, #tpu.memory_space<vmem>>, %arg3: memref<8x6xf32, #tpu.memory_space<vmem>>, %arg4: memref<8x1xf32, #tpu.memory_space<vmem>>, %arg5: memref<1x8x256xf32, #tpu.memory_space<vmem>>) attributes {dimension_semantics = [#tpu.dimension_semantics<parallel>, #tpu.dimension_semantics<parallel>], iteration_bounds = array<i64: 1, 1>, scalar_prefetch = 0 : i64, scratch_operands = 0 : i64, tpu.core_type = #tpu.core_type<tc>, window_params = [{transform_indices = @transform_0, window_bounds = array<i64: 1, 6, 256>}, {pipeline_mode = #tpu.pipeline_mode<synchronous>, transform_indices = @transform_1, window_bounds = array<i64: 8, 6>}, {pipeline_mode = #tpu.pipeline_mode<synchronous>, transform_indices = @transform_2, window_bounds = array<i64: 8, 1>}, {transform_indices = @transform_3, window_bounds = array<i64: 1, 8, 256>}]} {
    %c0 = arith.constant 0 : index
    %c0_0 = arith.constant 0 : index
    %0 = vector.load %arg3[%c0, %c0_0] : memref<8x6xf32, #tpu.memory_space<vmem>>, vector<8x6xf32>
    %c0_1 = arith.constant 0 : index
    %c0_2 = arith.constant 0 : index
    %c0_3 = arith.constant 0 : index
    %1 = vector.load %arg2[%c0_1, %c0_2, %c0_3] : memref<1x6x256xf32, #tpu.memory_space<vmem>>, vector<1x6x256xf32>
    %2 = vector.shape_cast %1 : vector<1x6x256xf32> to vector<6x256xf32>
    %cst = arith.constant dense<0.000000e+00> : vector<8x256xf32>
    %3 = tpu.matmul %0, %2, %cst {dimension_numbers = #tpu.dot_dimension_numbers<[1], [0], [0], [1], [0, 0, 1, 1], [], []>} : vector<8x6xf32>, vector<6x256xf32>, vector<8x256xf32> -> vector<8x256xf32>
    %c0_4 = arith.constant 0 : index
    %c0_5 = arith.constant 0 : index
    %4 = vector.load %arg4[%c0_4, %c0_5] : memref<8x1xf32, #tpu.memory_space<vmem>>, vector<8x1xf32>
    %5 = vector.broadcast %4 : vector<8x1xf32> to vector<8x256xf32>
    %6 = arith.addf %3, %5 : vector<8x256xf32>
    %c0_6 = arith.constant 0 : index
    %c0_7 = arith.constant 0 : index
    %c0_8 = arith.constant 0 : index
    %7 = vector.load %arg5[%c0_6, %c0_7, %c0_8] : memref<1x8x256xf32, #tpu.memory_space<vmem>>, vector<1x8x256xf32>
    %8 = vector.shape_cast %7 : vector<1x8x256xf32> to vector<8x256xf32>
    %9 = vector.shape_cast %6 : vector<8x256xf32> to vector<1x8x256xf32>
    tpu.vector_store %arg5[%c0_6, %c0_7, %c0_8], %9 {strides = array<i32>} : memref<1x8x256xf32, #tpu.memory_space<vmem>>, vector<1x8x256xf32>,
    return
  }
  func.func @transform_0(%arg0: i32, %arg1: i32) -> (i32, i32, i32) {
    %c0_i32 = arith.constant 0 : i32
    %c0_i32_0 = arith.constant 0 : i32
    return %arg0, %c0_i32, %arg1 : i32, i32, i32
  }
  func.func @transform_1(%arg0: i32, %arg1: i32) -> (i32, i32) {
    %c0_i32 = arith.constant 0 : i32
    %c0_i32_0 = arith.constant 0 : i32
    %c0_i32_1 = arith.constant 0 : i32
    return %c0_i32, %c0_i32_0 : i32, i32
  }
  func.func @transform_2(%arg0: i32, %arg1: i32) -> (i32, i32) {
    %c0_i32 = arith.constant 0 : i32
    %c0_i32_0 = arith.constant 0 : i32
    %c0_i32_1 = arith.constant 0 : i32
    return %c0_i32, %c0_i32_0 : i32, i32
  }
  func.func @transform_3(%arg0: i32, %arg1: i32) -> (i32, i32, i32) {
    %c0_i32 = arith.constant 0 : i32
    %c0_i32_0 = arith.constant 0 : i32
    return %arg0, %c0_i32, %arg1 : i32, i32, i32
  }
}

</mosaic_0001>

<llo_original>
// kernel: tpu_custom_call.1
$region0: #{tpu_custom_call.1}
  #allocation0 [shape = 'u32[]', space=smem, size = 0x4, offset = 0x4, fixed_abs, tag = 'smem constant byte address 0x4 - core index']
  #allocation1 [shape = 'u32[144,128]{1,0:T(1,128)}', space=vmem, size = 0x12000, scoped, tag = 'internal scratch']
  %s0 = inlined_call_operand.vmem [shape: f32[1,6,256], index: 0, kind: input, shape index: {}]
  %s1 = inlined_call_operand.vmem [shape: f32[8,6], index: 1, kind: input, shape index: {}]
  %s2 = inlined_call_operand.vmem [shape: f32[8,1], index: 2, kind: input, shape index: {}]
  %s3 = inlined_call_operand.hbm [shape: f32[1,8,256], index: 3, kind: output, shape index: {}]
  %s4 = sld [smem:[#allocation0]]
  $region22: #{tpu_custom_call.1} parent=0
    _
  %s6 = ssub.s32 1, %s4
  %s7 = scalar_select 0, %s6, %s4
  $region1: #{tpu_custom_call.1} parent=0
    #allocation2 [shape = 'u8[8192]{0}', space=vmem, size = 0x2000, scoped, tag = 'output window, operand 0, single buffered']
    #allocation3 [shape = 's32[1]{0}', space=sflag, size = 0x4, scoped, tag = 'scoped memory for tpu_custom_call.1']
    %8 = vsyncpa [#allocation3], 0
    // Predicated region
    $region2: #{tpu_custom_call.1} parent=1 // pred_check
      _
    $region3: #{tpu_custom_call.1} parent=1 // pred_check_branch
      %10 = sbr.rel (0) target = $region5
    $region4: #{tpu_custom_call.1} parent=1 // pred_region
      _
    $region5: #{tpu_custom_call.1} parent=1 // pred_fallthru
      _
    // Predicated region
    $region6: #{tpu_custom_call.1} parent=1 // pred_check
      _
    $region7: #{tpu_custom_call.1} parent=1 // pred_check_branch
      %12 = sbr.rel (0) target = $region9
    $region8: #{tpu_custom_call.1} parent=1 // pred_region
      _
    $region9: #{tpu_custom_call.1} parent=1 // pred_fallthru
      _
    // Predicated region
    $region10: #{tpu_custom_call.1} parent=1 // pred_check
      _
    $region11: #{tpu_custom_call.1} parent=1 // pred_check_branch
      %14 = sbr.rel (0) target = $region13
    $region12: #{tpu_custom_call.1} parent=1 // pred_region
      _
    $region13: #{tpu_custom_call.1} parent=1 // pred_fallthru
      _
    %v15 = vld [vmem:[%s1] sm:$0xff]
    %v16 = vld [vmem:[%s0] sm:$0x3f]
    %v17 = vld [vmem:[%s0 + $0x8] sm:$0x3f]
    %v18 = vld [vmem:[%s2] sm:$0xff]
    %20 = vset.pattern.permute.xlu0 0
    %21 = vperm.xlu0 %20, %v18
    %v22 = vpop.permute.xlu0 %21
    %vm24 = vcmask 48128
    %v26 = vsel %vm24, %v15, 0
    %vm28 = vcmask 1045504
    %v30 = vsel %vm28, %v16, 0
    %v33 = vsel %vm28, %v17, 0
    %35 = vmatprep.subr.mxu0 0.0
    %36 = vmatpush1.msra.mxu0 0.0
    %37 = vmatprep.subr.mxu0 0.0
    %38 = vmatpush1.msra.mxu0 0.0
    %39 = vmatprep.subr.mxu0 0.0
    %40 = vmatpush1.msra.mxu0 0.0
    %41 = vmatprep.subr.mxu0 0.0
    %42 = vmatpush1.msra.mxu0 0.0
    %43 = vmatprep.subr.mxu0 0.0
    %44 = vmatpush1.msra.mxu0 0.0
    %45 = vmatprep.subr.mxu0 0.0
    %46 = vmatpush1.msra.mxu0 0.0
    %47 = vmatprep.subr.mxu0 0.0
    %48 = vmatpush1.msra.mxu0 0.0
    %49 = vmatprep.subr.mxu0 0.0
    %50 = vmatpush1.msra.mxu0 0.0
    %51 = vmatprep.subr.mxu0 0.0
    %52 = vmatpush1.msra.mxu0 0.0
    %53 = vmatprep.subr.mxu0 0.0
    %54 = vmatpush1.msra.mxu0 0.0
    %55 = vmatprep.subr.mxu0 0.0
    %56 = vmatpush1.msra.mxu0 0.0
    %57 = vmatprep.subr.mxu0 0.0
    %58 = vmatpush1.msra.mxu0 0.0
    %59 = vmatprep.subr.mxu0 0.0
    %60 = vmatpush1.msra.mxu0 0.0
    %61 = vmatprep.subr.mxu0 0.0
    %62 = vmatpush1.msra.mxu0 0.0
    %63 = vmatprep.subr.mxu0 0.0
    %64 = vmatpush1.msra.mxu0 0.0
    %65 = vmatprep.subr.mxu0 %v33
    %66 = vmatpush1.msra.mxu0 %v30
    %67 = vmatprep.subr.mxu0 0.0
    %68 = vmatpush2.msra.mxu0 0.0
    %69 = vmatprep.subr.mxu0 0.0
    %70 = vmatpush2.msra.mxu0 0.0
    %71 = vmatprep.subr.mxu0 0.0
    %72 = vmatpush2.msra.mxu0 0.0
    %73 = vmatprep.subr.mxu0 0.0
    %74 = vmatpush2.msra.mxu0 0.0
    %75 = vmatprep.subr.mxu0 0.0
    %76 = vmatpush2.msra.mxu0 0.0
    %77 = vmatprep.subr.mxu0 0.0
    %78 = vmatpush2.msra.mxu0 0.0
    %79 = vmatprep.subr.mxu0 0.0
    %80 = vmatpush2.msra.mxu0 0.0
    %81 = vmatprep.subr.mxu0 0.0
    %82 = vmatpush2.msra.mxu0 0.0
    %83 = vmatprep.subr.mxu0 0.0
    %84 = vmatpush2.msra.mxu0 0.0
    %85 = vmatprep.subr.mxu0 0.0
    %86 = vmatpush2.msra.mxu0 0.0
    %87 = vmatprep.subr.mxu0 0.0
    %88 = vmatpush2.msra.mxu0 0.0
    %89 = vmatprep.subr.mxu0 0.0
    %90 = vmatpush2.msra.mxu0 0.0
    %91 = vmatprep.subr.mxu0 0.0
    %92 = vmatpush2.msra.mxu0 0.0
    %93 = vmatprep.subr.mxu0 0.0
    %94 = vmatpush2.msra.mxu0 0.0
    %95 = vmatprep.subr.mxu0 0.0
    %96 = vmatpush2.msra.mxu0 0.0
    %97 = vmatprep.subr.mxu0 0.0
    %98 = vmatpush2.msra.mxu0 0.0
    %99 = vmatprep.mubr.f32.mxu0 0.0
    %100 = vmatmul.mubr.f32.gmra.mxu0 %v26
    %v101 = vpop.f32.mrf.mxu0
    %v102 = vadd.f32 %v22, %v101
    %v103 = vpop.f32.mrf.mxu0
    %v104 = vadd.f32 %v22, %v103
    %105 = vdwg.mxu0
    %106 = vst [vmem:[#allocation2] sm:$0xff] %v102
    %107 = vst [vmem:[#allocation2 + $0x8] sm:$0xff] %v104
    // Predicated region
    $region14: #{tpu_custom_call.1} parent=1 // pred_check
      _
    $region15: #{tpu_custom_call.1} parent=1 // pred_check_branch
      %109 = sbr.rel (0) target = $region17
    $region16: #{tpu_custom_call.1} parent=1 // pred_region
      %s111 = ssub.s32 256, 256
      %112 = vsyncadd [#allocation3], %s111
      %s114 = sshll.u32 [#allocation2], 4
      %s115 = int_to_ptr.vmem [resolvable:$true] %s114
      %117 = dma.vmem_to_hbm [thread:$0]  %s115, 256, %s3, [#allocation3]
    $region17: #{tpu_custom_call.1} parent=1 // pred_fallthru
      _
    // Predicated region
    $region18: #{tpu_custom_call.1} parent=1 // pred_check
      _
    $region19: #{tpu_custom_call.1} parent=1 // pred_check_branch
      %119 = sbr.rel (0) target = $region21
    $region20: #{tpu_custom_call.1} parent=1 // pred_region
      %120 = dma.done [#allocation3], 256
    $region21: #{tpu_custom_call.1} parent=1 // pred_fallthru
      _
    %121 = vsyncpa [#allocation3], 1

</llo_original>
